<compile_context>
chip_gen: v7x
topology: tpu7x:2x2x1
jax: 0.10.0
libtpu: 0.0.40
codegen_flags: <defaults>
</compile_context>

<pallas_src>
import functools
import math

import jax
import jax.numpy as jnp
import numpy as np
from jax.experimental import pallas as pl
from jax.experimental.pallas import tpu as pltpu


# ----------------------------- Pallas kernels ------------------------------ #

def _fused_se_kernel(x_ref, w1t_ref, b1_ref, w2_ref, b2_ref, o_ref, *, inv_hw):
    """Single-pass SE: pool-sum + MLP + channel scale for one batch element.

    x_ref  : (1, C, HW) full per-batch slab
    w1t_ref: (C, S) = W1.T ; b1_ref: (1, S) ; w2_ref: (C, S) ; b2_ref: (C, 1)
    o_ref  : (1, C, HW) output
    """
    x = x_ref[0]                                                        # (C, HW)
    mean = jnp.sum(x.astype(jnp.float32), axis=-1, keepdims=True) * inv_hw   # (C, 1)
    # Linear(C -> S): h[s] = sum_c W1[s, c] * mean[c] + b1[s]
    h = jnp.sum(w1t_ref[...] * mean, axis=0, keepdims=True) + b1_ref[...]    # (1, S)
    h = h * (1.0 / (1.0 + jnp.exp(-h)))                                 # swish / SiLU
    # Linear(S -> C): z[c] = sum_s W2[c, s] * h[s] + b2[c]
    z = jnp.sum(w2_ref[...] * h, axis=1, keepdims=True) + b2_ref[...]        # (C, 1)
    s = 1.0 / (1.0 + jnp.exp(-z))                                       # (C, 1) f32
    # Scale multiply in the input's native dtype (bf16 stays bf16; f32 unchanged).
    o_ref[0] = x * s.astype(o_ref.dtype)


def _pool_se_kernel(x_ref, w1t_ref, b1_ref, w2_ref, b2_ref, s_ref, acc_ref,
                    *, inv_hw, hw, t_hw, need_mask):
    """Streaming global-average-pool + fused SE MLP at the last spatial tile.

    x_ref  : (1, C, T_HW) block of the (N, C, HW) input
    s_ref  : (1, C, 1) per-(n, channel) sigmoid scale output
    acc_ref: (C, 1) f32 VMEM accumulator, reset at tile 0
    """
    ti = pl.program_id(1)

    @pl.when(ti == 0)
    def _():
        acc_ref[...] = jnp.zeros_like(acc_ref)

    x = x_ref[0].astype(jnp.float32)                                    # (C, T_HW)
    if need_mask:
        # Tail tile overhangs HW: zero out the out-of-bounds lanes before summing.
        lane = jax.lax.broadcasted_iota(jnp.int32, x.shape, 1) + ti * t_hw
        x = jnp.where(lane < hw, x, 0.0)
    acc_ref[...] += jnp.sum(x, axis=-1, keepdims=True)

    # NOTE: s_ref's VMEM buffer is intentionally written only at the last tile;
    # under standard writeback-on-block-change semantics the earlier (unwritten)
    # states are never flushed to HBM.
    @pl.when(ti == pl.num_programs(1) - 1)
    def _():
        mean = acc_ref[...] * inv_hw                                     # (C, 1)
        h = jnp.sum(w1t_ref[...] * mean, axis=0, keepdims=True) + b1_ref[...]  # (1, S)
        h = h * (1.0 / (1.0 + jnp.exp(-h)))                              # swish / SiLU
        z = jnp.sum(w2_ref[...] * h, axis=1, keepdims=True) + b2_ref[...]       # (C, 1)
        s_ref[0] = (1.0 / (1.0 + jnp.exp(-z))).astype(s_ref.dtype)


def _scale_kernel(x_ref, s_ref, o_ref):
    """out = x * scale (native dtype), broadcast over the lane-dense spatial axis."""
    o_ref[0] = x_ref[0] * s_ref[0].astype(o_ref.dtype)     # s_ref[0]: (C, 1) f32


# ------------------------------- JAX glue ---------------------------------- #

def _choose_hw_tile(hw, c, itemsize, max_block_bytes):
    """Largest multiple-of-128 spatial tile whose (C, T) block fits the budget.

    Tile size is decoupled from H*W factorization: the grid uses pl.cdiv and the
    tail tile is masked (pool) / block-masked (scale).  If the whole extent fits
    the budget we use a single full-extent block (always layout-legal).
    """
    if hw <= 128:
        return hw
    cap = max_block_bytes // max(1, c * itemsize)
    t = max(128, (min(hw, cap) // 128) * 128)
    return hw if t >= hw else t


def se_module_forward(x, w1, b1, w2, b2, *,
                      fused_slab_bytes=8 * 1024 * 1024,
                      pool_block_bytes=8 * 1024 * 1024,
                      scale_block_bytes=4 * 1024 * 1024,
                      vmem_limit_bytes=48 * 1024 * 1024):
    """Forward pass matching PyTorch SEModule (swish = SiLU)."""
    n, c, h, w = x.shape
    s_ch, c_in = w1.shape
    assert c_in == c and w2.shape == (c, s_ch)
    assert b1.shape == (s_ch,) and b2.shape == (c,)
    hw = h * w
    x3 = x.reshape(n, c, hw)

    w1t = jnp.asarray(w1, jnp.float32).T                   # (C, S)
    b1r = jnp.asarray(b1, jnp.float32).reshape(1, s_ch)    # (1, S)
    w2f = jnp.asarray(w2, jnp.float32)                     # (C, S)
    b2r = jnp.asarray(b2, jnp.float32).reshape(c, 1)       # (C, 1)

    inv_hw = 1.0 / float(hw)
    slab_bytes = c * hw * x.dtype.itemsize

    # ---------------- Fused single-pass path (1 read + 1 write of x) -------- #
    if slab_bytes <= fused_slab_bytes:
        fused = functools.partial(_fused_se_kernel, inv_hw=inv_hw)
        out3 = pl.pallas_call(
            fused,
            out_shape=jax.ShapeDtypeStruct((n, c, hw), x.dtype),
            grid=(n,),
            in_specs=[
                pl.BlockSpec((1, c, hw), lambda ni: (ni, 0, 0)),
                pl.BlockSpec((c, s_ch), lambda ni: (0, 0)),
                pl.BlockSpec((1, s_ch), lambda ni: (0, 0)),
                pl.BlockSpec((c, s_ch), lambda ni: (0, 0)),
                pl.BlockSpec((c, 1), lambda ni: (0, 0)),
            ],
            out_specs=pl.BlockSpec((1, c, hw), lambda ni: (ni, 0, 0)),
            compiler_params=pltpu.CompilerParams(
                dimension_semantics=("parallel",),
                vmem_limit_bytes=vmem_limit_bytes),
        )(x3, w1t, b1r, w2f, b2r)
        return out3.reshape(n, c, h, w)

    # ---------------- Streaming two-pass path (2 reads + 1 write of x) ------ #
    # Kernel 1: pool kernel double-buffers only the input -> bigger tile budget.
    t_pool = _choose_hw_tile(hw, c, x.dtype.itemsize, pool_block_bytes)
    num_t_pool = pl.cdiv(hw, t_pool)
    need_mask = (hw % t_pool) != 0

    pool_kernel = functools.partial(_pool_se_kernel, inv_hw=inv_hw, hw=hw,
                                    t_hw=t_pool, need_mask=need_mask)
    scale = pl.pallas_call(
        pool_kernel,
        out_shape=jax.ShapeDtypeStruct((n, c, 1), jnp.float32),
        grid=(n, num_t_pool),
        in_specs=[
            pl.BlockSpec((1, c, t_pool), lambda ni, ti: (ni, 0, ti)),
            pl.BlockSpec((c, s_ch), lambda ni, ti: (0, 0)),
            pl.BlockSpec((1, s_ch), lambda ni, ti: (0, 0)),
            pl.BlockSpec((c, s_ch), lambda ni, ti: (0, 0)),
            pl.BlockSpec((c, 1), lambda ni, ti: (0, 0)),
        ],
        out_specs=pl.BlockSpec((1, c, 1), lambda ni, ti: (ni, 0, 0)),
        scratch_shapes=[pltpu.VMEM((c, 1), jnp.float32)],
        compiler_params=pltpu.CompilerParams(
            dimension_semantics=("parallel", "arbitrary"),
            vmem_limit_bytes=vmem_limit_bytes),
    )(x3, w1t, b1r, w2f, b2r)

    # Kernel 2: scale kernel holds input + output (each double-buffered).
    t_scale = _choose_hw_tile(hw, c, x.dtype.itemsize, scale_block_bytes)
    num_t_scale = pl.cdiv(hw, t_scale)

    out3 = pl.pallas_call(
        _scale_kernel,
        out_shape=jax.ShapeDtypeStruct((n, c, hw), x.dtype),
        grid=(n, num_t_scale),
        in_specs=[
            pl.BlockSpec((1, c, t_scale), lambda ni, ti: (ni, 0, ti)),
            pl.BlockSpec((1, c, 1), lambda ni, ti: (ni, 0, 0)),
        ],
        out_specs=pl.BlockSpec((1, c, t_scale), lambda ni, ti: (ni, 0, ti)),
        compiler_params=pltpu.CompilerParams(
            dimension_semantics=("parallel", "parallel"),
            vmem_limit_bytes=vmem_limit_bytes),
    )(x3, scale)

    return out3.reshape(n, c, h, w)


# ------------------------------ test driver -------------------------------- #

def _reference(x, w1, b1, w2, b2):
    p = x.mean(axis=(2, 3))                       # (N, C) global average pool
    hid = p @ w1.T + b1
    hid = hid * jax.nn.sigmoid(hid)               # SiLU / swish
    z = hid @ w2.T + b2
    s = jax.nn.sigmoid(z)
    return x * s[:, :, None, None]


def _make_params(key, c, s):
    kw1, kb1, kw2, kb2 = jax.random.split(key, 4)
    bound1 = 1.0 / math.sqrt(c)
    w1 = jax.random.uniform(kw1, (s, c), minval=-bound1, maxval=bound1, dtype=jnp.float32)
    b1 = jax.random.uniform(kb1, (s,), minval=-bound1, maxval=bound1, dtype=jnp.float32)
    bound2 = 1.0 / math.sqrt(s)
    w2 = jax.random.uniform(kw2, (c, s), minval=-bound2, maxval=bound2, dtype=jnp.float32)
    b2 = jax.random.uniform(kb2, (c,), minval=-bound2, maxval=bound2, dtype=jnp.float32)
    return w1, b1, w2, b2


if __name__ == "__main__":
    # SEModule(in_channels=32, squeeze_channels=8, swish=SiLU)
    N, C, H, W = 2, 32, 16, 16
    S = 8

    key = jax.random.PRNGKey(0)
    kx, kx2, kp = jax.random.split(key, 3)
    w1, b1, w2, b2 = _make_params(kp, C, S)

    # 1) Fused single-pass path (default budgets; slab easily fits VMEM).
    x = jax.random.normal(kx, (N, C, H, W), dtype=jnp.float32)
    out = jax.block_until_ready(se_module_forward(x, w1, b1, w2, b2))
    ref = _reference(x, w1, b1, w2, b2)
    np.testing.assert_allclose(np.asarray(out), np.asarray(ref), atol=1e-4, rtol=1e-4)
    assert out.shape == (N, C, H, W)

    # 2) Streaming two-pass path (force it with tiny budgets; HW % 128 == 0).
    out_s = jax.block_until_ready(
        se_module_forward(x, w1, b1, w2, b2,
                          fused_slab_bytes=0,
                          pool_block_bytes=16 * 1024,
                          scale_block_bytes=16 * 1024))
    np.testing.assert_allclose(np.asarray(out_s), np.asarray(ref), atol=1e-4, rtol=1e-4)

    # 3) Streaming path with a masked tail tile (HW = 144 is not a multiple of 128).
    H2 = W2 = 12
    x2 = jax.random.normal(kx2, (N, C, H2, W2), dtype=jnp.float32)
    out_t = jax.block_until_ready(
        se_module_forward(x2, w1, b1, w2, b2,
                          fused_slab_bytes=0,
                          pool_block_bytes=16 * 1024,
                          scale_block_bytes=16 * 1024))
    ref_t = _reference(x2, w1, b1, w2, b2)
    np.testing.assert_allclose(np.asarray(out_t), np.asarray(ref_t), atol=1e-4, rtol=1e-4)

    print("KERNEL_OK")
</pallas_src>

<mosaic_0001>
module attributes {stable_mosaic.version = 11 : i64} {
  func.func @_fused_se_kernel(%arg0: i32, %arg1: memref<1x32x256xf32, #tpu.memory_space<vmem>>, %arg2: memref<32x8xf32, #tpu.memory_space<vmem>>, %arg3: memref<1x8xf32, #tpu.memory_space<vmem>>, %arg4: memref<32x8xf32, #tpu.memory_space<vmem>>, %arg5: memref<32x1xf32, #tpu.memory_space<vmem>>, %arg6: memref<1x32x256xf32, #tpu.memory_space<vmem>>) attributes {dimension_semantics = [#tpu.dimension_semantics<parallel>], iteration_bounds = array<i64: 2>, scalar_prefetch = 0 : i64, scratch_operands = 0 : i64, tpu.core_type = #tpu.core_type<tc>, window_params = [{transform_indices = @transform_0, window_bounds = array<i64: 1, 32, 256>}, {pipeline_mode = #tpu.pipeline_mode<synchronous>, transform_indices = @transform_1, window_bounds = array<i64: 32, 8>}, {pipeline_mode = #tpu.pipeline_mode<synchronous>, transform_indices = @transform_2, window_bounds = array<i64: 1, 8>}, {pipeline_mode = #tpu.pipeline_mode<synchronous>, transform_indices = @transform_3, window_bounds = array<i64: 32, 8>}, {pipeline_mode = #tpu.pipeline_mode<synchronous>, transform_indices = @transform_4, window_bounds = array<i64: 32, 1>}, {transform_indices = @transform_5, window_bounds = array<i64: 1, 32, 256>}]} {
    %c0 = arith.constant 0 : index
    %c0_0 = arith.constant 0 : index
    %c0_1 = arith.constant 0 : index
    %0 = vector.load %arg1[%c0, %c0_0, %c0_1] : memref<1x32x256xf32, #tpu.memory_space<vmem>>, vector<1x32x256xf32>
    %1 = vector.shape_cast %0 : vector<1x32x256xf32> to vector<32x256xf32>
    %cst = arith.constant dense<0.000000e+00> : vector<32xf32>
    %2 = vector.multi_reduction <add>, %1, %cst [1] : vector<32x256xf32> to vector<32xf32>
    %3 = vector.shape_cast %2 : vector<32xf32> to vector<32x1xf32>
    %cst_2 = arith.constant 3.906250e-03 : f32
    %4 = vector.broadcast %cst_2 : f32 to vector<32x1xf32>
    %5 = arith.mulf %3, %4 : vector<32x1xf32>
    %c0_3 = arith.constant 0 : index
    %c0_4 = arith.constant 0 : index
    %6 = vector.load %arg2[%c0_3, %c0_4] : memref<32x8xf32, #tpu.memory_space<vmem>>, vector<32x8xf32>
    %7 = vector.broadcast %5 : vector<32x1xf32> to vector<32x8xf32>
    %8 = arith.mulf %6, %7 : vector<32x8xf32>
    %cst_5 = arith.constant dense<0.000000e+00> : vector<8xf32>
    %9 = vector.multi_reduction <add>, %8, %cst_5 [0] : vector<32x8xf32> to vector<8xf32>
    %10 = vector.shape_cast %9 : vector<8xf32> to vector<1x8xf32>
    %c0_6 = arith.constant 0 : index
    %c0_7 = arith.constant 0 : index
    %11 = vector.load %arg3[%c0_6, %c0_7] : memref<1x8xf32, #tpu.memory_space<vmem>>, vector<1x8xf32>
    %12 = arith.addf %10, %11 : vector<1x8xf32>
    %cst_8 = arith.constant 0.000000e+00 : f32
    %13 = vector.broadcast %cst_8 : f32 to vector<1x8xf32>
    %14 = arith.subf %13, %12 : vector<1x8xf32>
    %15 = math.exp %14 : vector<1x8xf32>
    %cst_9 = arith.constant 1.000000e+00 : f32
    %16 = vector.broadcast %cst_9 : f32 to vector<1x8xf32>
    %17 = arith.addf %16, %15 : vector<1x8xf32>
    %cst_10 = arith.constant 1.000000e+00 : f32
    %18 = vector.broadcast %cst_10 : f32 to vector<1x8xf32>
    %19 = arith.divf %18, %17 : vector<1x8xf32>
    %20 = arith.mulf %12, %19 : vector<1x8xf32>
    %c0_11 = arith.constant 0 : index
    %c0_12 = arith.constant 0 : index
    %21 = vector.load %arg4[%c0_11, %c0_12] : memref<32x8xf32, #tpu.memory_space<vmem>>, vector<32x8xf32>
    %22 = vector.broadcast %20 : vector<1x8xf32> to vector<32x8xf32>
    %23 = arith.mulf %21, %22 : vector<32x8xf32>
    %cst_13 = arith.constant dense<0.000000e+00> : vector<32xf32>
    %24 = vector.multi_reduction <add>, %23, %cst_13 [1] : vector<32x8xf32> to vector<32xf32>
    %25 = vector.shape_cast %24 : vector<32xf32> to vector<32x1xf32>
    %c0_14 = arith.constant 0 : index
    %c0_15 = arith.constant 0 : index
    %26 = vector.load %arg5[%c0_14, %c0_15] : memref<32x1xf32, #tpu.memory_space<vmem>>, vector<32x1xf32>
    %27 = arith.addf %25, %26 : vector<32x1xf32>
    %cst_16 = arith.constant 0.000000e+00 : f32
    %28 = vector.broadcast %cst_16 : f32 to vector<32x1xf32>
    %29 = arith.subf %28, %27 : vector<32x1xf32>
    %30 = math.exp %29 : vector<32x1xf32>
    %cst_17 = arith.constant 1.000000e+00 : f32
    %31 = vector.broadcast %cst_17 : f32 to vector<32x1xf32>
    %32 = arith.addf %31, %30 : vector<32x1xf32>
    %cst_18 = arith.constant 1.000000e+00 : f32
    %33 = vector.broadcast %cst_18 : f32 to vector<32x1xf32>
    %34 = arith.divf %33, %32 : vector<32x1xf32>
    %35 = vector.broadcast %34 : vector<32x1xf32> to vector<32x256xf32>
    %36 = arith.mulf %1, %35 : vector<32x256xf32>
    %c0_19 = arith.constant 0 : index
    %c0_20 = arith.constant 0 : index
    %c0_21 = arith.constant 0 : index
    %37 = vector.load %arg6[%c0_19, %c0_20, %c0_21] : memref<1x32x256xf32, #tpu.memory_space<vmem>>, vector<1x32x256xf32>
    %38 = vector.shape_cast %37 : vector<1x32x256xf32> to vector<32x256xf32>
    %39 = vector.shape_cast %36 : vector<32x256xf32> to vector<1x32x256xf32>
    tpu.vector_store %arg6[%c0_19, %c0_20, %c0_21], %39 {strides = array<i32>} : memref<1x32x256xf32, #tpu.memory_space<vmem>>, vector<1x32x256xf32>,
    return
  }
  func.func @transform_0(%arg0: i32) -> (i32, i32, i32) {
    %c0_i32 = arith.constant 0 : i32
    %c0_i32_0 = arith.constant 0 : i32
    %c0_i32_1 = arith.constant 0 : i32
    return %arg0, %c0_i32, %c0_i32_0 : i32, i32, i32
  }
  func.func @transform_1(%arg0: i32) -> (i32, i32) {
    %c0_i32 = arith.constant 0 : i32
    %c0_i32_0 = arith.constant 0 : i32
    %c0_i32_1 = arith.constant 0 : i32
    return %c0_i32, %c0_i32_0 : i32, i32
  }
  func.func @transform_2(%arg0: i32) -> (i32, i32) {
    %c0_i32 = arith.constant 0 : i32
    %c0_i32_0 = arith.constant 0 : i32
    %c0_i32_1 = arith.constant 0 : i32
    return %c0_i32, %c0_i32_0 : i32, i32
  }
  func.func @transform_3(%arg0: i32) -> (i32, i32) {
    %c0_i32 = arith.constant 0 : i32
    %c0_i32_0 = arith.constant 0 : i32
    %c0_i32_1 = arith.constant 0 : i32
    return %c0_i32, %c0_i32_0 : i32, i32
  }
  func.func @transform_4(%arg0: i32) -> (i32, i32) {
    %c0_i32 = arith.constant 0 : i32
    %c0_i32_0 = arith.constant 0 : i32
    %c0_i32_1 = arith.constant 0 : i32
    return %c0_i32, %c0_i32_0 : i32, i32
  }
  func.func @transform_5(%arg0: i32) -> (i32, i32, i32) {
    %c0_i32 = arith.constant 0 : i32
    %c0_i32_0 = arith.constant 0 : i32
    %c0_i32_1 = arith.constant 0 : i32
    return %arg0, %c0_i32, %c0_i32_0 : i32, i32, i32
  }
}

</mosaic_0001>

<llo_original>
// kernel: tpu_custom_call.1
$region0: #{tpu_custom_call.1}
  #allocation0 [shape = 'u32[]', space=smem, size = 0x4, offset = 0x4, fixed_abs, tag = 'smem constant byte address 0x4 - core index']
  #allocation1 [shape = 'u32[144,128]{1,0:T(1,128)}', space=vmem, size = 0x12000, scoped, tag = 'internal scratch']
  %s0 = inlined_call_operand.hbm [shape: f32[2,32,256], index: 0, kind: input, shape index: {}]
  %s1 = inlined_call_operand.vmem [shape: f32[32,8], index: 1, kind: input, shape index: {}]
  %s2 = inlined_call_operand.vmem [shape: f32[1,8], index: 2, kind: input, shape index: {}]
  %s3 = inlined_call_operand.vmem [shape: f32[32,8], index: 3, kind: input, shape index: {}]
  %s4 = inlined_call_operand.vmem [shape: f32[32,1], index: 4, kind: input, shape index: {}]
  %s5 = inlined_call_operand.hbm [shape: f32[2,32,256], index: 5, kind: output, shape index: {}]
  %s6 = sld [smem:[#allocation0]]
  $region57: #{tpu_custom_call.1} parent=0
    _
  %s8 = ssub.s32 1, %s6
  %s9 = scalar_select 0, %s8, %s6
  $region1: #{tpu_custom_call.1} parent=0
    #allocation2 [shape = 'u8[65536]{0}', space=vmem, size = 0x10000, scoped, tag = 'input window, operand 0']
    #allocation3 [shape = 's32[2]{0}', space=sflag, size = 0x8, scoped, tag = 'scoped memory for tpu_custom_call.1']
    #allocation4 [shape = 's32[2]{0}', space=sflag, size = 0x8, scoped, tag = 'scoped memory for tpu_custom_call.1']
    #allocation5 [shape = 'u8[65536]{0}', space=vmem, size = 0x10000, scoped, tag = 'output window, operand 0']
    %10 = vsyncpa [#allocation3], 0
    %s11 = scalar_lea.sflag [#allocation3], 1
    %12 = vsyncpa %s11, 0
    %13 = vsyncpa [#allocation4], 0
    %s14 = scalar_lea.sflag [#allocation4], 1
    %15 = vsyncpa %s14, 0
    loop: start=0, step=1, limit=4
    $region2: #{tpu_custom_call.1} parent=1 // loop_pre_header
      _
    $region3: #{tpu_custom_call.1} parent=1 // loop_header
      %s17 = sphi 0, %s21
      %p18 = scmp.ge.s32.totalorder %s17, 4
      %s27 = sphi 0, %s29
      %s30 = sphi 0, %s27
      %s31 = sphi 0, %s30
      %s47 = sphi 0, %s31
      %s51 = sphi 0, %s51
      %s53 = sphi 0, %s51
      %s54 = sphi 0, %s53
      %s68 = sphi 0, %s54
      %s72 = sphi 0, %s72
      %s74 = sphi 0, %s72
      %s75 = sphi 0, %s74
      %s89 = sphi 0, %s75
      %s93 = sphi 0, %s93
      %s95 = sphi 0, %s93
      %s96 = sphi 0, %s95
      %s110 = sphi 0, %s96
      %s114 = sphi 0, %s114
      %s116 = sphi 0, %s114
      %s117 = sphi 0, %s116
      %s131 = sphi 0, %s117
      %s137 = sphi 0, %s139
      %s140 = sphi 0, %s137
      %s141 = sphi 0, %s140
      %s157 = sphi 0, %s141
    $region4: #{tpu_custom_call.1} parent=1 // loop_header_branch
      %20 = sbr.rel (%p18) target = $region8
    $region5: #{tpu_custom_call.1} parent=1 // loop_body
      %s22 = ssub.s32 %s17, 1
      %s23 = ssub.s32 %s17, 2
      %s24 = sadd.s32 %s17, 1
      %s25 = ssub.s32 %s17, %s24
      %p26 = scmp.eq.s32.totalorder %s25, 0
      %s28 = sadd.s32 %s27, 1
      %s29 = scalar_select %p26, %s27, %s28
      %p32 = pneg %p26
      %p33 = scmp.eq.s32.totalorder %s17, 1
      %p34 = por %p32, %p33
      %p35 = scmp.ne.s32.totalorder %s27, %s30
      %p36 = scmp.eq.s32.totalorder %s17, 0
      %p37 = por %p35, %p36
      %p38 = scmp.ne.s32.totalorder %s27, %s30
      %p39 = scmp.eq.s32.totalorder %s22, 1
      %p40 = por %p38, %p39
      %p41 = scmp.ne.s32.totalorder %s30, %s31
      %p42 = scmp.eq.s32.totalorder %s22, 0
      %p43 = por %p41, %p42
      %p44 = scmp.ne.s32.totalorder %s30, %s31
      %p45 = scmp.eq.s32.totalorder %s23, 1
      %p46 = por %p44, %p45
      %p48 = scmp.ne.s32.totalorder %s31, %s47
      %p49 = scmp.eq.s32.totalorder %s23, 0
      %p50 = por %p48, %p49
      %s52 = sadd.s32 %s51, 1
      %p55 = scmp.eq.s32.totalorder %s17, 1
      %p56 = scmp.ne.s32.totalorder %s51, %s53
      %p57 = scmp.eq.s32.totalorder %s17, 0
      %p58 = por %p56, %p57
      %p59 = scmp.ne.s32.totalorder %s51, %s53
      %p60 = scmp.eq.s32.totalorder %s22, 1
      %p61 = por %p59, %p60
      %p62 = scmp.ne.s32.totalorder %s53, %s54
      %p63 = scmp.eq.s32.totalorder %s22, 0
      %p64 = por %p62, %p63
      %p65 = scmp.ne.s32.totalorder %s53, %s54
      %p66 = scmp.eq.s32.totalorder %s23, 1
      %p67 = por %p65, %p66
      %p69 = scmp.ne.s32.totalorder %s54, %s68
      %p70 = scmp.eq.s32.totalorder %s23, 0
      %p71 = por %p69, %p70
      %s73 = sadd.s32 %s72, 1
      %p76 = scmp.eq.s32.totalorder %s17, 1
      %p77 = scmp.ne.s32.totalorder %s72, %s74
      %p78 = scmp.eq.s32.totalorder %s17, 0
      %p79 = por %p77, %p78
      %p80 = scmp.ne.s32.totalorder %s72, %s74
      %p81 = scmp.eq.s32.totalorder %s22, 1
      %p82 = por %p80, %p81
      %p83 = scmp.ne.s32.totalorder %s74, %s75
      %p84 = scmp.eq.s32.totalorder %s22, 0
      %p85 = por %p83, %p84
      %p86 = scmp.ne.s32.totalorder %s74, %s75
      %p87 = scmp.eq.s32.totalorder %s23, 1
      %p88 = por %p86, %p87
      %p90 = scmp.ne.s32.totalorder %s75, %s89
      %p91 = scmp.eq.s32.totalorder %s23, 0
      %p92 = por %p90, %p91
      %s94 = sadd.s32 %s93, 1
      %p97 = scmp.eq.s32.totalorder %s17, 1
      %p98 = scmp.ne.s32.totalorder %s93, %s95
      %p99 = scmp.eq.s32.totalorder %s17, 0
      %p100 = por %p98, %p99
      %p101 = scmp.ne.s32.totalorder %s93, %s95
      %p102 = scmp.eq.s32.totalorder %s22, 1
      %p103 = por %p101, %p102
      %p104 = scmp.ne.s32.totalorder %s95, %s96
      %p105 = scmp.eq.s32.totalorder %s22, 0
      %p106 = por %p104, %p105
      %p107 = scmp.ne.s32.totalorder %s95, %s96
      %p108 = scmp.eq.s32.totalorder %s23, 1
      %p109 = por %p107, %p108
      %p111 = scmp.ne.s32.totalorder %s96, %s110
      %p112 = scmp.eq.s32.totalorder %s23, 0
      %p113 = por %p111, %p112
      %s115 = sadd.s32 %s114, 1
      %p118 = scmp.eq.s32.totalorder %s17, 1
      %p119 = scmp.ne.s32.totalorder %s114, %s116
      %p120 = scmp.eq.s32.totalorder %s17, 0
      %p121 = por %p119, %p120
      %p122 = scmp.ne.s32.totalorder %s114, %s116
      %p123 = scmp.eq.s32.totalorder %s22, 1
      %p124 = por %p122, %p123
      %p125 = scmp.ne.s32.totalorder %s116, %s117
      %p126 = scmp.eq.s32.totalorder %s22, 0
      %p127 = por %p125, %p126
      %p128 = scmp.ne.s32.totalorder %s116, %s117
      %p129 = scmp.eq.s32.totalorder %s23, 1
      %p130 = por %p128, %p129
      %p132 = scmp.ne.s32.totalorder %s117, %s131
      %p133 = scmp.eq.s32.totalorder %s23, 0
      %p134 = por %p132, %p133
      %s135 = ssub.s32 %s17, %s24
      %p136 = scmp.eq.s32.totalorder %s135, 0
      %s138 = sadd.s32 %s137, 1
      %s139 = scalar_select %p136, %s137, %s138
      %p142 = pneg %p136
      %p143 = scmp.eq.s32.totalorder %s17, 1
      %p144 = por %p142, %p143
      %p145 = scmp.ne.s32.totalorder %s137, %s140
      %p146 = scmp.eq.s32.totalorder %s17, 0
      %p147 = por %p145, %p146
      %p148 = scmp.ne.s32.totalorder %s137, %s140
      %p149 = scmp.eq.s32.totalorder %s22, 1
      %p150 = por %p148, %p149
      %p151 = scmp.ne.s32.totalorder %s140, %s141
      %p152 = scmp.eq.s32.totalorder %s22, 0
      %p153 = por %p151, %p152
      %p154 = scmp.ne.s32.totalorder %s140, %s141
      %p155 = scmp.eq.s32.totalorder %s23, 1
      %p156 = por %p154, %p155
      %p158 = scmp.ne.s32.totalorder %s141, %s157
      %p159 = scmp.eq.s32.totalorder %s23, 0
      %p160 = por %p158, %p159
      %p161 = scmp.le.s32.totalorder 1, %s17
      %p162 = scmp.lt.s32.totalorder %s17, 3
      %p163 = pnand %p161, %p162
      %p164 = pneg %p163
      // Predicated region
      $region9: #{tpu_custom_call.1} parent=5 // pred_check
        _
      $region10: #{tpu_custom_call.1} parent=5 // pred_check_branch
        %166 = sbr.rel (%p163) target = $region12
      $region11: #{tpu_custom_call.1} parent=5 // pred_region
        %s167 = ssub.s32 %s17, 1
        // Predicated region
        $region13: #{tpu_custom_call.1} parent=11 // pred_check
          %p168 = pneg %p64
        $region14: #{tpu_custom_call.1} parent=11 // pred_check_branch
          %170 = sbr.rel (%p168) target = $region16
        $region15: #{tpu_custom_call.1} parent=11 // pred_region
          _
        $region16: #{tpu_custom_call.1} parent=11 // pred_fallthru
          _
        // Predicated region
        $region17: #{tpu_custom_call.1} parent=11 // pred_check
          %p171 = pneg %p85
        $region18: #{tpu_custom_call.1} parent=11 // pred_check_branch
          %173 = sbr.rel (%p171) target = $region20
        $region19: #{tpu_custom_call.1} parent=11 // pred_region
          _
        $region20: #{tpu_custom_call.1} parent=11 // pred_fallthru
          _
        // Predicated region
        $region21: #{tpu_custom_call.1} parent=11 // pred_check
          %p174 = pneg %p106
        $region22: #{tpu_custom_call.1} parent=11 // pred_check_branch
          %176 = sbr.rel (%p174) target = $region24
        $region23: #{tpu_custom_call.1} parent=11 // pred_region
          _
        $region24: #{tpu_custom_call.1} parent=11 // pred_fallthru
          _
        // Predicated region
        $region25: #{tpu_custom_call.1} parent=11 // pred_check
          %p177 = pneg %p127
        $region26: #{tpu_custom_call.1} parent=11 // pred_check_branch
          %179 = sbr.rel (%p177) target = $region28
        $region27: #{tpu_custom_call.1} parent=11 // pred_region
          _
        $region28: #{tpu_custom_call.1} parent=11 // pred_fallthru
          _
      $region12: #{tpu_custom_call.1} parent=5 // pred_fallthru
        _
      %p180 = scmp.lt.s32.totalorder %s17, 2
      // Predicated region
      $region29: #{tpu_custom_call.1} parent=5 // pred_check
        %p181 = pneg %p180
      $region30: #{tpu_custom_call.1} parent=5 // pred_check_branch
        %183 = sbr.rel (%p181) target = $region32
      $region31: #{tpu_custom_call.1} parent=5 // pred_region
        // Predicated region
        $region33: #{tpu_custom_call.1} parent=31 // pred_check
          %p184 = pneg %p37
        $region34: #{tpu_custom_call.1} parent=31 // pred_check_branch
          %186 = sbr.rel (%p184) target = $region36
        $region35: #{tpu_custom_call.1} parent=31 // pred_region
          %s187 = sand.u32 %s27, 1
          %s188 = scalar_lea.sflag [#allocation3], %s187
          %s189 = sand.u32 %s27, 1
          %s190 = smul.addr %s189, 64
          %s191 = scalar_lea.vmem [#allocation2], %s190
          %s193 = ssub.s32 1024, 1024
          %194 = vsyncadd %s188, %s193
          %s195 = smul.addr %s17, 8
          %s196 = smul.addr %s195, 128
          %s197 = scalar_lea.hbm %s0, %s196
          %s198 = sshll.u32 %s191, 4
          %s199 = int_to_ptr.vmem [resolvable:$true] %s198
          %204 = dma.hbm_to_vmem [thread:$0]  %s197, 1024, %s199, %s188, 256, 256, 16
        $region36: #{tpu_custom_call.1} parent=31 // pred_fallthru
          _
      $region32: #{tpu_custom_call.1} parent=5 // pred_fallthru
        _
      %p205 = scmp.le.s32.totalorder 1, %s17
      %p206 = scmp.lt.s32.totalorder %s17, 3
      %p207 = pnand %p205, %p206
      %p208 = pneg %p207
      // Predicated region
      $region37: #{tpu_custom_call.1} parent=5 // pred_check
        _
      $region38: #{tpu_custom_call.1} parent=5 // pred_check_branch
        %210 = sbr.rel (%p207) target = $region40
      $region39: #{tpu_custom_call.1} parent=5 // pred_region
        %s211 = ssub.s32 %s17, 1
        %s212 = sand.u32 %s30, 1
        %s213 = scalar_lea.sflag [#allocation3], %s212
        %s214 = sand.u32 %s30, 1
        %s215 = smul.addr %s214, 64
        %s216 = scalar_lea.vmem [#allocation2], %s215
        // Predicated region
        $region41: #{tpu_custom_call.1} parent=39 // pred_check
          %p217 = pneg %p43
        $region42: #{tpu_custom_call.1} parent=39 // pred_check_branch
          %219 = sbr.rel (%p217) target = $region44
        $region43: #{tpu_custom_call.1} parent=39 // pred_region
          %220 = dma.done %s213, 1024
        $region44: #{tpu_custom_call.1} parent=39 // pred_fallthru
          _
        %s221 = sand.u32 %s30, 1
        %s222 = scalar_lea.sflag [#allocation3], %s221
        %s223 = sand.u32 %s30, 1
        %s224 = smul.addr %s223, 64
        %s225 = scalar_lea.vmem [#allocation2], %s224
        %p226 = pneg %p43
        %p227 = pneg %p40
        %p228 = pneg %p64
        %p229 = pneg %p61
        %p230 = pneg %p85
        %p231 = pneg %p82
        %p232 = pneg %p106
        %p233 = pneg %p103
        %p234 = pneg %p127
        %p235 = pneg %p124
        %p236 = pneg %p153
        %p237 = pneg %p150
        %s238 = sand.u32 %s140, 1
        %s239 = scalar_lea.sflag [#allocation4], %s238
        %s240 = sand.u32 %s140, 1
        %s241 = smul.addr %s240, 64
        %s242 = scalar_lea.vmem [#allocation5], %s241
        %v243 = vld [vmem:[%s216] sm:$0xff]
        %v244 = vld [vmem:[%s216 + $0x8] sm:$0xff]
        %v245 = vld [vmem:[%s216 + $0x10] sm:$0xff]
        %v246 = vld [vmem:[%s216 + $0x18] sm:$0xff]
        %v247 = vld [vmem:[%s216 + $0x20] sm:$0xff]
        %v248 = vld [vmem:[%s216 + $0x28] sm:$0xff]
        %v249 = vld [vmem:[%s216 + $0x30] sm:$0xff]
        %v250 = vld [vmem:[%s216 + $0x38] sm:$0xff]
        %v251 = vadd.f32 %v243, %v244
        %252 = vadd.xlane.f32.xlu0 %v251
        %v253 = vpop.xlane.xlu0 %252
        %v254 = vadd.f32 %v245, %v246
        %255 = vadd.xlane.f32.xlu0 %v254
        %v256 = vpop.xlane.xlu0 %255
        %v257 = vadd.f32 %v247, %v248
        %258 = vadd.xlane.f32.xlu0 %v257
        %v259 = vpop.xlane.xlu0 %258
        %v260 = vadd.f32 %v249, %v250
        %261 = vadd.xlane.f32.xlu0 %v260
        %v262 = vpop.xlane.xlu0 %261
        %v263 = vmul.f32 %v253, 0.00390625
        %v264 = vmul.f32 %v256, 0.00390625
        %v265 = vmul.f32 %v259, 0.00390625
        %v266 = vmul.f32 %v262, 0.00390625
        %v267 = vld [vmem:[%s1] sm:$0xff]
        %v268 = vld [vmem:[%s1 + $0x8] sm:$0xff]
        %v269 = vld [vmem:[%s1 + $0x10] sm:$0xff]
        %v270 = vld [vmem:[%s1 + $0x18] sm:$0xff]
        %v271 = vmul.f32 %v267, %v263
        %v272 = vmul.f32 %v268, %v264
        %v273 = vmul.f32 %v269, %v265
        %v274 = vmul.f32 %v270, %v266
        %vm275 = vcmask 64512
        %v276 = vsel %vm275, %v271, 0.0
        %v277 = vsel %vm275, %v272, 0.0
        %v278 = vadd.f32 %v276, %v277
        %v279 = vsel %vm275, %v273, 0.0
        %v280 = vadd.f32 %v278, %v279
        %v281 = vsel %vm275, %v274, 0.0
        %v282 = vadd.f32 %v280, %v281
        %v283 = vrot.slane %v282, 4
        %v284 = vadd.f32 %v282, %v283
        %v285 = vrot.slane %v284, 2
        %v286 = vadd.f32 %v284, %v285
        %v287 = vrot.slane %v286, 1
        %v288 = vadd.f32 %v286, %v287
        %v289 = vld [vmem:[%s2] sm:$0x1]
        %v290 = vadd.f32 %v288, %v289
        %v291 = vsub.f32 0.0, %v290
        %v292 = vmul.f32 %v291, 1.442695
        %v293 = vpow.pop %v292
        %v294 = vadd.f32 %v293, 1.0
        %v295 = vrcp.pop %v294
        %v296 = vmul.f32 1.0, %v295
        %v297 = vmul.f32 %v290, %v296
        %v298 = vld [vmem:[%s3] sm:$0xff]
        %v299 = vld [vmem:[%s3 + $0x8] sm:$0xff]
        %v300 = vld [vmem:[%s3 + $0x10] sm:$0xff]
        %v301 = vld [vmem:[%s3 + $0x18] sm:$0xff]
        %v302 = vlaneseq
        %v303 = vshrl.u32 %v302, 7
        %v304 = vsub.s32 0, %v303
        %v305 = vrot.slane %v297, %v304
        %v306 = vmul.f32 %v298, %v305
        %v307 = vmul.f32 %v299, %v305
        %v308 = vmul.f32 %v300, %v305
        %v309 = vmul.f32 %v301, %v305
        %v310 = vsel %vm275, %v306, 0.0
        %311 = vadd.xlane.f32.xlu0 %v310
        %v312 = vpop.xlane.xlu0 %311
        %v313 = vsel %vm275, %v307, 0.0
        %314 = vadd.xlane.f32.xlu0 %v313
        %v315 = vpop.xlane.xlu0 %314
        %v316 = vsel %vm275, %v308, 0.0
        %317 = vadd.xlane.f32.xlu0 %v316
        %v318 = vpop.xlane.xlu0 %317
        %v319 = vsel %vm275, %v309, 0.0
        %320 = vadd.xlane.f32.xlu0 %v319
        %v321 = vpop.xlane.xlu0 %320
        %v322 = vld [vmem:[%s4] sm:$0xff]
        %v323 = vld [vmem:[%s4 + $0x8] sm:$0xff]
        %v324 = vld [vmem:[%s4 + $0x10] sm:$0xff]
        %v325 = vld [vmem:[%s4 + $0x18] sm:$0xff]
        %v326 = vadd.f32 %v312, %v322
        %v327 = vadd.f32 %v315, %v323
        %v328 = vadd.f32 %v318, %v324
        %v329 = vadd.f32 %v321, %v325
        %v330 = vsub.f32 0.0, %v326
        %v331 = vsub.f32 0.0, %v327
        %v332 = vsub.f32 0.0, %v328
        %v333 = vsub.f32 0.0, %v329
        %v334 = vmul.f32 %v330, 1.442695
        %v335 = vpow.pop %v334
        %v336 = vmul.f32 %v331, 1.442695
        %v337 = vpow.pop %v336
        %v338 = vmul.f32 %v332, 1.442695
        %v339 = vpow.pop %v338
        %v340 = vmul.f32 %v333, 1.442695
        %v341 = vpow.pop %v340
        %v342 = vadd.f32 %v335, 1.0
        %v343 = vadd.f32 %v337, 1.0
        %v344 = vadd.f32 %v339, 1.0
        %v345 = vadd.f32 %v341, 1.0
        %v346 = vrcp.pop %v342
        %v347 = vmul.f32 1.0, %v346
        %v348 = vrcp.pop %v343
        %v349 = vmul.f32 1.0, %v348
        %v350 = vrcp.pop %v344
        %v351 = vmul.f32 1.0, %v350
        %v352 = vrcp.pop %v345
        %v353 = vmul.f32 1.0, %v352
        %355 = vset.pattern.permute.xlu0 0
        %356 = vperm.xlu0 %355, %v347
        %v357 = vpop.permute.xlu0 %356
        %360 = vset.pattern.permute.xlu0 0
        %361 = vperm.xlu0 %360, %v349
        %v362 = vpop.permute.xlu0 %361
        %365 = vset.pattern.permute.xlu0 0
        %366 = vperm.xlu0 %365, %v351
        %v367 = vpop.permute.xlu0 %366
        %370 = vset.pattern.permute.xlu0 0
        %371 = vperm.xlu0 %370, %v353
        %v372 = vpop.permute.xlu0 %371
        %v374 = vmul.f32 %v243, %v357
        %v375 = vmul.f32 %v244, %v357
        %v376 = vmul.f32 %v245, %v362
        %v377 = vmul.f32 %v246, %v362
        %v378 = vmul.f32 %v247, %v367
        %v379 = vmul.f32 %v248, %v367
        %v380 = vmul.f32 %v249, %v372
        %v381 = vmul.f32 %v250, %v372
        %382 = vst [vmem:[%s242] sm:$0xff] %v374
        %383 = vst [vmem:[%s242 + $0x8] sm:$0xff] %v375
        %384 = vst [vmem:[%s242 + $0x10] sm:$0xff] %v376
        %385 = vst [vmem:[%s242 + $0x18] sm:$0xff] %v377
        %386 = vst [vmem:[%s242 + $0x20] sm:$0xff] %v378
        %387 = vst [vmem:[%s242 + $0x28] sm:$0xff] %v379
        %388 = vst [vmem:[%s242 + $0x30] sm:$0xff] %v380
        %389 = vst [vmem:[%s242 + $0x38] sm:$0xff] %v381
        %s390 = sand.u32 %s140, 1
        %s391 = scalar_lea.sflag [#allocation4], %s390
        %s392 = sand.u32 %s140, 1
        %s393 = smul.addr %s392, 64
        %s394 = scalar_lea.vmem [#allocation5], %s393
        // Predicated region
        $region45: #{tpu_custom_call.1} parent=39 // pred_check
          %p395 = pneg %p150
        $region46: #{tpu_custom_call.1} parent=39 // pred_check_branch
          %397 = sbr.rel (%p395) target = $region48
        $region47: #{tpu_custom_call.1} parent=39 // pred_region
          %s399 = ssub.s32 1024, 1024
          %400 = vsyncadd %s391, %s399
          %s401 = smul.addr %s22, 8
          %s402 = smul.addr %s401, 128
          %s403 = scalar_lea.hbm %s5, %s402
          %s404 = sshll.u32 %s394, 4
          %s405 = int_to_ptr.vmem [resolvable:$true] %s404
          %410 = dma.vmem_to_hbm [thread:$0]  %s405, 1024, %s403, %s391, 256, 256, 16
        $region48: #{tpu_custom_call.1} parent=39 // pred_fallthru
          _
      $region40: #{tpu_custom_call.1} parent=5 // pred_fallthru
        _
      %p411 = scmp.le.s32.totalorder 2, %s17
      // Predicated region
      $region49: #{tpu_custom_call.1} parent=5 // pred_check
        %p412 = pneg %p411
      $region50: #{tpu_custom_call.1} parent=5 // pred_check_branch
        %414 = sbr.rel (%p412) target = $region52
      $region51: #{tpu_custom_call.1} parent=5 // pred_region
        %s415 = ssub.s32 %s17, 2
        // Predicated region
        $region53: #{tpu_custom_call.1} parent=51 // pred_check
          %p416 = pneg %p156
        $region54: #{tpu_custom_call.1} parent=51 // pred_check_branch
          %418 = sbr.rel (%p416) target = $region56
        $region55: #{tpu_custom_call.1} parent=51 // pred_region
          %s419 = sand.u32 %s141, 1
          %s420 = scalar_lea.sflag [#allocation4], %s419
          %s421 = sand.u32 %s141, 1
          %s422 = smul.addr %s421, 64
          %s423 = scalar_lea.vmem [#allocation5], %s422
          %424 = dma.done %s420, 1024
        $region56: #{tpu_custom_call.1} parent=51 // pred_fallthru
          _
      $region52: #{tpu_custom_call.1} parent=5 // pred_fallthru
        _
    $region6: #{tpu_custom_call.1} parent=1 // loop_footer
      %s21 = sadd.s32 1, %s17
    $region7: #{tpu_custom_call.1} parent=1 // loop_footer_branch
      %16 = sbr.rel target = $region3
    $region8: #{tpu_custom_call.1} parent=1 // loop_exit
      _
    %425 = vsyncpa [#allocation3], 1
    %s426 = scalar_lea.sflag [#allocation3], 1
    %427 = vsyncpa %s426, 1
    %428 = vsyncpa [#allocation4], 1
    %s429 = scalar_lea.sflag [#allocation4], 1
    %430 = vsyncpa %s429, 1

</llo_original>
